<compile_context>
chip_gen: v5e
topology: v5e:2x2
jax: 0.10.0
libtpu: 0.0.40
codegen_flags: <defaults>
</compile_context>

<pallas_src>
import functools

import jax
import jax.numpy as jnp
from jax.experimental import pallas as pl
from jax.experimental.pallas import tpu as pltpu


def _round_up(n: int, m: int) -> int:
    return ((n + m - 1) // m) * m


def mlp_kernel(x_ref, w1_ref, b1_ref, w2_ref, b2_ref, out_ref):
    # Two MXU matmuls (bf16 operands, f32 accumulation) + VPU bias/ReLU.
    x = x_ref[...]                                            # (TB, dim_p) bf16
    h = jnp.dot(x, w1_ref[...], preferred_element_type=jnp.float32)
    h = jnp.maximum(h + b1_ref[...], 0.0)                     # f32 bias + ReLU
    y = jnp.dot(h.astype(w2_ref.dtype), w2_ref[...],
                preferred_element_type=jnp.float32)
    out_ref[...] = (y + b2_ref[...]).astype(out_ref.dtype)


@functools.partial(jax.jit, static_argnames=("block_batch",))
def net_forward(x, w1, b1, w2, b2, *, block_batch=512):
    """x: [B, dim]; w1: [dim, hidden]; b1: [hidden]; w2: [hidden, classes]; b2: [classes]."""
    B, dim = x.shape
    hidden = w1.shape[1]
    classes = w2.shape[1]
    out_dtype = x.dtype

    # Pad feature dims to full 128-lane tiles; batch to a multiple of TB (>=8).
    dim_p = _round_up(dim, 128)
    hid_p = _round_up(hidden, 128)
    cls_p = _round_up(classes, 128)
    TB = _round_up(min(block_batch, _round_up(B, 8)), 8)
    B_p = _round_up(B, TB)

    cdt = jnp.bfloat16  # MXU operand dtype
    x_p = jnp.zeros((B_p, dim_p), cdt).at[:B, :dim].set(x.astype(cdt))
    w1_p = jnp.zeros((dim_p, hid_p), cdt).at[:dim, :hidden].set(w1.astype(cdt))
    w2_p = jnp.zeros((hid_p, cls_p), cdt).at[:hidden, :classes].set(w2.astype(cdt))
    b1_p = jnp.zeros((1, hid_p), jnp.float32).at[0, :hidden].set(b1.astype(jnp.float32))
    b2_p = jnp.zeros((1, cls_p), jnp.float32).at[0, :classes].set(b2.astype(jnp.float32))

    # VMEM budget: resident weights/biases + double-buffered x/out tiles
    # + f32 intermediate; add headroom, cap below the smallest scoped limit.
    itemsize_out = jnp.dtype(out_dtype).itemsize
    need = (dim_p * hid_p * 2 + hid_p * cls_p * 2          # weights (bf16)
            + (hid_p + cls_p) * 4                          # biases (f32)
            + 2 * TB * dim_p * 2                           # x double buffer
            + 2 * TB * cls_p * itemsize_out                # out double buffer
            + TB * hid_p * 4)                              # f32 hidden activ.
    vmem_limit = int(min(max(4 * need, 4 << 20), 30 << 20))

    grid = (B_p // TB,)
    out_p = pl.pallas_call(
        mlp_kernel,
        out_shape=jax.ShapeDtypeStruct((B_p, cls_p), out_dtype),
        grid_spec=pltpu.PrefetchScalarGridSpec(
            num_scalar_prefetch=0,
            grid=grid,
            in_specs=[
                pl.BlockSpec((TB, dim_p), lambda i: (i, 0)),      # x tile (streamed)
                pl.BlockSpec((dim_p, hid_p), lambda i: (0, 0)),   # w1 (resident)
                pl.BlockSpec((1, hid_p), lambda i: (0, 0)),       # b1 (resident)
                pl.BlockSpec((hid_p, cls_p), lambda i: (0, 0)),   # w2 (resident)
                pl.BlockSpec((1, cls_p), lambda i: (0, 0)),       # b2 (resident)
            ],
            out_specs=pl.BlockSpec((TB, cls_p), lambda i: (i, 0)),
        ),
        compiler_params=pltpu.CompilerParams(
            dimension_semantics=("parallel",),
            vmem_limit_bytes=vmem_limit,
        ),
    )(x_p, w1_p, b1_p, w2_p, b2_p)

    # Slice away batch / class padding.
    return out_p[:B, :classes]


def init_params(key, dim, hidden, classes, dtype=jnp.float32):
    """PyTorch-style (Kaiming-uniform) init; weights stored [in, out]."""
    k1, k2, k3, k4 = jax.random.split(key, 4)
    bound1 = 1.0 / (dim ** 0.5)
    bound2 = 1.0 / (hidden ** 0.5)
    w1 = jax.random.uniform(k1, (dim, hidden), dtype, -bound1, bound1)
    b1 = jax.random.uniform(k2, (hidden,), dtype, -bound1, bound1)
    w2 = jax.random.uniform(k3, (hidden, classes), dtype, -bound2, bound2)
    b2 = jax.random.uniform(k4, (classes,), dtype, -bound2, bound2)
    return w1, b1, w2, b2


if __name__ == "__main__":
    dim, hidden, classes = 16, 32, 8
    batch = 4

    key = jax.random.PRNGKey(0)
    kx, kp = jax.random.split(key)
    x = jax.random.normal(kx, (batch, dim), jnp.float32)
    w1, b1, w2, b2 = init_params(kp, dim, hidden, classes)

    out = net_forward(x, w1, b1, w2, b2)
    jax.block_until_ready(out)
    assert out.shape == (batch, classes)

    # Reference with the same bf16 operand rounding (f32 accumulation).
    xb = x.astype(jnp.bfloat16).astype(jnp.float32)
    w1b = w1.astype(jnp.bfloat16).astype(jnp.float32)
    w2b = w2.astype(jnp.bfloat16).astype(jnp.float32)
    h = jnp.maximum(xb @ w1b + b1, 0.0)
    ref = h.astype(jnp.bfloat16).astype(jnp.float32) @ w2b + b2
    assert jnp.allclose(out, ref, atol=1e-3, rtol=1e-3), (
        f"max abs err {jnp.max(jnp.abs(out - ref))}")

    # Loose sanity check against the pure-f32 math of the PyTorch module.
    ref_f32 = jnp.maximum(x @ w1 + b1, 0.0) @ w2 + b2
    assert jnp.allclose(out, ref_f32, atol=5e-2, rtol=5e-2)

    print("KERNEL_OK")
</pallas_src>

<mosaic_0001>
module attributes {stable_mosaic.version = 11 : i64} {
  func.func @mlp_kernel(%arg0: i32, %arg1: memref<8x128xbf16, #tpu.memory_space<vmem>>, %arg2: memref<128x128xbf16, #tpu.memory_space<vmem>>, %arg3: memref<1x128xf32, #tpu.memory_space<vmem>>, %arg4: memref<128x128xbf16, #tpu.memory_space<vmem>>, %arg5: memref<1x128xf32, #tpu.memory_space<vmem>>, %arg6: memref<8x128xf32, #tpu.memory_space<vmem>>) attributes {dimension_semantics = [#tpu.dimension_semantics<parallel>], iteration_bounds = array<i64: 1>, scalar_prefetch = 0 : i64, scratch_operands = 0 : i64, tpu.core_type = #tpu.core_type<tc>, window_params = [{transform_indices = @transform_0, window_bounds = array<i64: 8, 128>}, {pipeline_mode = #tpu.pipeline_mode<synchronous>, transform_indices = @transform_1, window_bounds = array<i64: 128, 128>}, {pipeline_mode = #tpu.pipeline_mode<synchronous>, transform_indices = @transform_2, window_bounds = array<i64: 1, 128>}, {pipeline_mode = #tpu.pipeline_mode<synchronous>, transform_indices = @transform_3, window_bounds = array<i64: 128, 128>}, {pipeline_mode = #tpu.pipeline_mode<synchronous>, transform_indices = @transform_4, window_bounds = array<i64: 1, 128>}, {transform_indices = @transform_5, window_bounds = array<i64: 8, 128>}]} {
    %c0 = arith.constant 0 : index
    %c0_0 = arith.constant 0 : index
    %0 = vector.load %arg1[%c0, %c0_0] : memref<8x128xbf16, #tpu.memory_space<vmem>>, vector<8x128xbf16>
    %c0_1 = arith.constant 0 : index
    %c0_2 = arith.constant 0 : index
    %1 = vector.load %arg2[%c0_1, %c0_2] : memref<128x128xbf16, #tpu.memory_space<vmem>>, vector<128x128xbf16>
    %cst = arith.constant dense<0.000000e+00> : vector<8x128xf32>
    %2 = tpu.matmul %0, %1, %cst {dimension_numbers = #tpu.dot_dimension_numbers<[1], [0], [0], [1], [0, 0, 1, 1], [], []>} : vector<8x128xbf16>, vector<128x128xbf16>, vector<8x128xf32> -> vector<8x128xf32>
    %c0_3 = arith.constant 0 : index
    %c0_4 = arith.constant 0 : index
    %3 = vector.load %arg3[%c0_3, %c0_4] : memref<1x128xf32, #tpu.memory_space<vmem>>, vector<1x128xf32>
    %4 = vector.broadcast %3 : vector<1x128xf32> to vector<8x128xf32>
    %5 = arith.addf %2, %4 : vector<8x128xf32>
    %cst_5 = arith.constant 0.000000e+00 : f32
    %6 = vector.broadcast %cst_5 : f32 to vector<8x128xf32>
    %7 = arith.maximumf %5, %6 : vector<8x128xf32>
    %8 = arith.truncf %7 : vector<8x128xf32> to vector<8x128xbf16>
    %c0_6 = arith.constant 0 : index
    %c0_7 = arith.constant 0 : index
    %9 = vector.load %arg4[%c0_6, %c0_7] : memref<128x128xbf16, #tpu.memory_space<vmem>>, vector<128x128xbf16>
    %cst_8 = arith.constant dense<0.000000e+00> : vector<8x128xf32>
    %10 = tpu.matmul %8, %9, %cst_8 {dimension_numbers = #tpu.dot_dimension_numbers<[1], [0], [0], [1], [0, 0, 1, 1], [], []>} : vector<8x128xbf16>, vector<128x128xbf16>, vector<8x128xf32> -> vector<8x128xf32>
    %c0_9 = arith.constant 0 : index
    %c0_10 = arith.constant 0 : index
    %11 = vector.load %arg5[%c0_9, %c0_10] : memref<1x128xf32, #tpu.memory_space<vmem>>, vector<1x128xf32>
    %12 = vector.broadcast %11 : vector<1x128xf32> to vector<8x128xf32>
    %13 = arith.addf %10, %12 : vector<8x128xf32>
    %c0_11 = arith.constant 0 : index
    %c0_12 = arith.constant 0 : index
    %14 = vector.load %arg6[%c0_11, %c0_12] : memref<8x128xf32, #tpu.memory_space<vmem>>, vector<8x128xf32>
    tpu.vector_store %arg6[%c0_11, %c0_12], %13 {strides = array<i32>} : memref<8x128xf32, #tpu.memory_space<vmem>>, vector<8x128xf32>,
    return
  }
  func.func @transform_0(%arg0: i32) -> (i32, i32) {
    %c0_i32 = arith.constant 0 : i32
    %c0_i32_0 = arith.constant 0 : i32
    return %arg0, %c0_i32 : i32, i32
  }
  func.func @transform_1(%arg0: i32) -> (i32, i32) {
    %c0_i32 = arith.constant 0 : i32
    %c0_i32_0 = arith.constant 0 : i32
    %c0_i32_1 = arith.constant 0 : i32
    return %c0_i32, %c0_i32_0 : i32, i32
  }
  func.func @transform_2(%arg0: i32) -> (i32, i32) {
    %c0_i32 = arith.constant 0 : i32
    %c0_i32_0 = arith.constant 0 : i32
    %c0_i32_1 = arith.constant 0 : i32
    return %c0_i32, %c0_i32_0 : i32, i32
  }
  func.func @transform_3(%arg0: i32) -> (i32, i32) {
    %c0_i32 = arith.constant 0 : i32
    %c0_i32_0 = arith.constant 0 : i32
    %c0_i32_1 = arith.constant 0 : i32
    return %c0_i32, %c0_i32_0 : i32, i32
  }
  func.func @transform_4(%arg0: i32) -> (i32, i32) {
    %c0_i32 = arith.constant 0 : i32
    %c0_i32_0 = arith.constant 0 : i32
    %c0_i32_1 = arith.constant 0 : i32
    return %c0_i32, %c0_i32_0 : i32, i32
  }
  func.func @transform_5(%arg0: i32) -> (i32, i32) {
    %c0_i32 = arith.constant 0 : i32
    %c0_i32_0 = arith.constant 0 : i32
    return %arg0, %c0_i32 : i32, i32
  }
}

</mosaic_0001>

<llo_original>
// kernel: net_forward.1
$region0: #{net_forward.1}
  #allocation0 [shape = 'u32[]', space=smem, size = 0x4, offset = 0x4, fixed_abs, tag = 'smem constant byte address 0x4 - core index']
  #allocation1 [shape = 'u32[72,128]{1,0:T(1,128)}', space=vmem, size = 0x9000, scoped, tag = 'internal scratch']
  %s0 = inlined_call_operand.vmem [shape: bf16[8,128], index: 0, kind: input, shape index: {}]
  %s1 = inlined_call_operand.vmem [shape: bf16[128,128], index: 1, kind: input, shape index: {}]
  %s2 = inlined_call_operand.vmem [shape: f32[1,128], index: 2, kind: input, shape index: {}]
  %s3 = inlined_call_operand.vmem [shape: bf16[128,128], index: 3, kind: input, shape index: {}]
  %s4 = inlined_call_operand.vmem [shape: f32[1,128], index: 4, kind: input, shape index: {}]
  %s5 = inlined_call_operand.vmem [shape: f32[8,128], index: 5, kind: output, shape index: {}]
  %s6 = sld [smem:[#allocation0]]
  $region30: #{net_forward.1} parent=0
    _
  %s8 = ssub.s32 1, %s6
  %s9 = scalar_select 0, %s8, %s6
  // Predicated region
  $region2: #{net_forward.1} parent=0 // pred_check
    _
  $region3: #{net_forward.1} parent=0 // pred_check_branch
    %11 = sbr.rel (0) target = $region5
  $region4: #{net_forward.1} parent=0 // pred_region
    _
  $region5: #{net_forward.1} parent=0 // pred_fallthru
    _
  // Predicated region
  $region6: #{net_forward.1} parent=0 // pred_check
    _
  $region7: #{net_forward.1} parent=0 // pred_check_branch
    %13 = sbr.rel (0) target = $region9
  $region8: #{net_forward.1} parent=0 // pred_region
    _
  $region9: #{net_forward.1} parent=0 // pred_fallthru
    _
  // Predicated region
  $region10: #{net_forward.1} parent=0 // pred_check
    _
  $region11: #{net_forward.1} parent=0 // pred_check_branch
    %15 = sbr.rel (0) target = $region13
  $region12: #{net_forward.1} parent=0 // pred_region
    _
  $region13: #{net_forward.1} parent=0 // pred_fallthru
    _
  // Predicated region
  $region14: #{net_forward.1} parent=0 // pred_check
    _
  $region15: #{net_forward.1} parent=0 // pred_check_branch
    %17 = sbr.rel (0) target = $region17
  $region16: #{net_forward.1} parent=0 // pred_region
    _
  $region17: #{net_forward.1} parent=0 // pred_fallthru
    _
  // Predicated region
  $region18: #{net_forward.1} parent=0 // pred_check
    _
  $region19: #{net_forward.1} parent=0 // pred_check_branch
    %19 = sbr.rel (0) target = $region21
  $region20: #{net_forward.1} parent=0 // pred_region
    _
  $region21: #{net_forward.1} parent=0 // pred_fallthru
    _
  %v20 = vld [vmem:[%s0] sm:$0xf]
  %v21 = vld [vmem:[%s1] sm:$0xf]
  %v22 = vld [vmem:[%s1 + $0x4] sm:$0xf]
  %v23 = vld [vmem:[%s1 + $0x8] sm:$0xf]
  %v24 = vld [vmem:[%s1 + $0xc] sm:$0xf]
  %v25 = vld [vmem:[%s1 + $0x10] sm:$0xf]
  %v26 = vld [vmem:[%s1 + $0x14] sm:$0xf]
  %v27 = vld [vmem:[%s1 + $0x18] sm:$0xf]
  %v28 = vld [vmem:[%s1 + $0x1c] sm:$0xf]
  %v29 = vld [vmem:[%s1 + $0x20] sm:$0xf]
  %v30 = vld [vmem:[%s1 + $0x24] sm:$0xf]
  %v31 = vld [vmem:[%s1 + $0x28] sm:$0xf]
  %v32 = vld [vmem:[%s1 + $0x2c] sm:$0xf]
  %v33 = vld [vmem:[%s1 + $0x30] sm:$0xf]
  %v34 = vld [vmem:[%s1 + $0x34] sm:$0xf]
  %v35 = vld [vmem:[%s1 + $0x38] sm:$0xf]
  %v36 = vld [vmem:[%s1 + $0x3c] sm:$0xf]
  %v37 = vld [vmem:[%s2] sm:$0x1]
  %v39 = vperm.slane %v37, 0
  %v57 = vunpack.c.l.b16 %v21
  %v58 = vunpack.c.l.b16 %v22
  %v59 = vunpack.c.l.b16 %v23
  %v60 = vunpack.c.l.b16 %v24
  %v61 = vunpack.c.l.b16 %v25
  %v62 = vunpack.c.l.b16 %v26
  %v63 = vunpack.c.l.b16 %v27
  %v64 = vunpack.c.l.b16 %v28
  %v65 = vunpack.c.l.b16 %v29
  %v66 = vunpack.c.l.b16 %v30
  %v67 = vunpack.c.l.b16 %v31
  %v68 = vunpack.c.l.b16 %v32
  %v69 = vunpack.c.l.b16 %v33
  %v70 = vunpack.c.l.b16 %v34
  %v71 = vunpack.c.l.b16 %v35
  %v72 = vunpack.c.l.b16 %v36
  %v73 = vpack.c.b16 %v58, %v57
  %v74 = vpack.c.b16 %v60, %v59
  %v75 = vpack.c.b16 %v62, %v61
  %v76 = vpack.c.b16 %v64, %v63
  %v77 = vpack.c.b16 %v66, %v65
  %v78 = vpack.c.b16 %v68, %v67
  %v79 = vpack.c.b16 %v70, %v69
  %v80 = vpack.c.b16 %v72, %v71
  %89 = vmatpush.bf16.msra.mxu0 %v80
  %90 = vmatpush.bf16.msra.mxu0 %v79
  %91 = vmatpush.bf16.msra.mxu0 %v78
  %92 = vmatpush.bf16.msra.mxu0 %v77
  %93 = vmatpush.bf16.msra.mxu0 %v76
  %94 = vmatpush.bf16.msra.mxu0 %v75
  %95 = vmatpush.bf16.msra.mxu0 %v74
  %96 = vmatpush.bf16.msra.mxu0 %v73
  %97 = vmatmul.bf16.gmra.mxu0 %v20
  %v98 = vpop.f32.mrf.mxu0
  %v99 = vadd.f32 %v39, %v98
  %v100 = vpop.f32.mrf.mxu0
  %101 = vdwg.mxu0
  %v102 = vmax.f32 %v99, 0.0
  %v103 = vpack.c.bf16 %v102, %v102
  %v104 = vld [vmem:[%s3] sm:$0xf]
  %v105 = vld [vmem:[%s3 + $0x4] sm:$0xf]
  %v106 = vld [vmem:[%s3 + $0x8] sm:$0xf]
  %v107 = vld [vmem:[%s3 + $0xc] sm:$0xf]
  %v108 = vld [vmem:[%s3 + $0x10] sm:$0xf]
  %v109 = vld [vmem:[%s3 + $0x14] sm:$0xf]
  %v110 = vld [vmem:[%s3 + $0x18] sm:$0xf]
  %v111 = vld [vmem:[%s3 + $0x1c] sm:$0xf]
  %v112 = vld [vmem:[%s3 + $0x20] sm:$0xf]
  %v113 = vld [vmem:[%s3 + $0x24] sm:$0xf]
  %v114 = vld [vmem:[%s3 + $0x28] sm:$0xf]
  %v115 = vld [vmem:[%s3 + $0x2c] sm:$0xf]
  %v116 = vld [vmem:[%s3 + $0x30] sm:$0xf]
  %v117 = vld [vmem:[%s3 + $0x34] sm:$0xf]
  %v118 = vld [vmem:[%s3 + $0x38] sm:$0xf]
  %v119 = vld [vmem:[%s3 + $0x3c] sm:$0xf]
  %v120 = vld [vmem:[%s4] sm:$0x1]
  %v122 = vperm.slane %v120, 0
  %v140 = vunpack.c.l.b16 %v104
  %v141 = vunpack.c.l.b16 %v105
  %v142 = vunpack.c.l.b16 %v106
  %v143 = vunpack.c.l.b16 %v107
  %v144 = vunpack.c.l.b16 %v108
  %v145 = vunpack.c.l.b16 %v109
  %v146 = vunpack.c.l.b16 %v110
  %v147 = vunpack.c.l.b16 %v111
  %v148 = vunpack.c.l.b16 %v112
  %v149 = vunpack.c.l.b16 %v113
  %v150 = vunpack.c.l.b16 %v114
  %v151 = vunpack.c.l.b16 %v115
  %v152 = vunpack.c.l.b16 %v116
  %v153 = vunpack.c.l.b16 %v117
  %v154 = vunpack.c.l.b16 %v118
  %v155 = vunpack.c.l.b16 %v119
  %v156 = vpack.c.b16 %v141, %v140
  %v157 = vpack.c.b16 %v143, %v142
  %v158 = vpack.c.b16 %v145, %v144
  %v159 = vpack.c.b16 %v147, %v146
  %v160 = vpack.c.b16 %v149, %v148
  %v161 = vpack.c.b16 %v151, %v150
  %v162 = vpack.c.b16 %v153, %v152
  %v163 = vpack.c.b16 %v155, %v154
  %172 = vmatpush.bf16.msra.mxu0 %v163
  %173 = vmatpush.bf16.msra.mxu0 %v162
  %174 = vmatpush.bf16.msra.mxu0 %v161
  %175 = vmatpush.bf16.msra.mxu0 %v160
  %176 = vmatpush.bf16.msra.mxu0 %v159
  %177 = vmatpush.bf16.msra.mxu0 %v158
  %178 = vmatpush.bf16.msra.mxu0 %v157
  %179 = vmatpush.bf16.msra.mxu0 %v156
  %180 = vmatmul.bf16.gmra.mxu0 %v103
  %v181 = vpop.f32.mrf.mxu0
  %v182 = vadd.f32 %v122, %v181
  %v183 = vpop.f32.mrf.mxu0
  %184 = vdwg.mxu0
  %185 = vst [vmem:[%s5] sm:$0xff] %v182
  // Predicated region
  $region22: #{net_forward.1} parent=0 // pred_check
    _
  $region23: #{net_forward.1} parent=0 // pred_check_branch
    %187 = sbr.rel (0) target = $region25
  $region24: #{net_forward.1} parent=0 // pred_region
    _
  $region25: #{net_forward.1} parent=0 // pred_fallthru
    _
  // Predicated region
  $region26: #{net_forward.1} parent=0 // pred_check
    _
  $region27: #{net_forward.1} parent=0 // pred_check_branch
    %189 = sbr.rel (0) target = $region29
  $region28: #{net_forward.1} parent=0 // pred_region
    _
  $region29: #{net_forward.1} parent=0 // pred_fallthru
    _

</llo_original>
